<compile_context>
chip_gen: v7x
topology: tpu7x:2x2x1
jax: 0.10.0
libtpu: 0.0.40
codegen_flags: <defaults>
</compile_context>

<pallas_src>
import math

import jax
import jax.numpy as jnp
import numpy as np
from jax.experimental import pallas as pl
from jax.experimental.pallas import tpu as pltpu

EPS = 1e-4
T_SUM = 0.3


# ----------------------------------------------------------------------------
# Parameter preparation (plain JAX glue): EDM2-style weight normalization.
# MPConv forward uses  w_hat = normalize(w) * (gain / sqrt(fan_in)),  gain = 1.
# ----------------------------------------------------------------------------
def mp_normalize_weight(w):
    # w: (C_out, C_in, K)
    fan_in = w.shape[1] * w.shape[2]
    w32 = w.astype(jnp.float32)
    norm = jnp.sqrt(jnp.sum(jnp.square(w32), axis=(1, 2), keepdims=True))
    norm = EPS + norm * (1.0 / math.sqrt(fan_in))   # torch.add(eps, norm, alpha=1/sqrt(fan_in))
    w_hat = w32 / norm
    return w_hat * (1.0 / math.sqrt(fan_in))        # gain = 1


# ----------------------------------------------------------------------------
# Kernel 1: merged qkv 1x1 conv + per-head normalization, bf16 channels-last out.
# ----------------------------------------------------------------------------
def _make_proj_kernel(C, D, H):
    inv_sqrt_d = 1.0 / math.sqrt(D)

    def kernel(x_ref, w3_ref, q_ref, k_ref, v_ref):
        # x_ref: (C, TL) f32 channels-first tile.  Transpose once in-kernel (XLU) so the 1x1
        # conv becomes a lane-dense (TL, C) x (C, 3C) MXU matmul; no wrapper HBM transpose.
        xl = jnp.transpose(x_ref[...], (1, 0)).astype(jnp.bfloat16)            # (TL, C) bf16
        y = jnp.dot(xl, w3_ref[...], preferred_element_type=jnp.float32)       # (TL, 3C) f32

        def head_norm(t, extra_scale=None):
            # normalize(t, dim=head_dim): t / (eps + ||t||/sqrt(D)); reciprocal on the EUP.
            n = jnp.sqrt(jnp.sum(t * t, axis=-1, keepdims=True))
            r = pl.reciprocal(EPS + n * inv_sqrt_d, approx=True)
            if extra_scale is not None:
                r = r * extra_scale          # fold 1/sqrt(D) into q: (TL,1) mults, not (TQ,L)
            return t * r

        qs, ks, vs = [], [], []
        for h in range(H):                   # static unroll; H is small
            lo = h * D
            qs.append(head_norm(y[:, lo:lo + D], inv_sqrt_d))
            ks.append(head_norm(y[:, C + lo:C + lo + D]))
            vs.append(head_norm(y[:, 2 * C + lo:2 * C + lo + D]))
        q_ref[...] = jnp.concatenate(qs, axis=-1).astype(jnp.bfloat16)
        k_ref[...] = jnp.concatenate(ks, axis=-1).astype(jnp.bfloat16)
        v_ref[...] = jnp.concatenate(vs, axis=-1).astype(jnp.bfloat16)

    return kernel


# ----------------------------------------------------------------------------
# Kernel 2: attention over cached bf16 Q/K/V + merged proj_out + mp_sum residual.
# ----------------------------------------------------------------------------
def _make_attn_kernel(C, D, H):
    mp_scale = 1.0 / math.sqrt((1.0 - T_SUM) ** 2 + T_SUM ** 2)

    def kernel(x_ref, q_ref, k_ref, v_ref, wp_ref, o_ref):
        q_all = q_ref[...]                   # (TQ, C) bf16, head-normalized, pre-scaled 1/sqrt(D)
        k_all = k_ref[...]                   # (L,  C) bf16
        v_all = v_ref[...]                   # (L,  C) bf16

        o_heads = []
        for h in range(H):                   # static unroll
            lo = h * D
            q = q_all[:, lo:lo + D]
            k = k_all[:, lo:lo + D]
            v = v_all[:, lo:lo + D]

            s = jax.lax.dot_general(q, k, (((1,), (1,)), ((), ())),
                                    preferred_element_type=jnp.float32)        # (TQ, L) f32
            m = jnp.max(s, axis=-1, keepdims=True)
            # TODO(synk): on v6e/v7x compute exp in bf16 (cast s-m first) for ~2x EUP throughput;
            # kept f32 here so the same kernel is also exact-ish on v5e (no bf16 EUP).
            p = jnp.exp(s - m)                                                  # (TQ, L) f32
            denom = jnp.sum(p, axis=-1, keepdims=True)                          # (TQ, 1)  f32
            o_h = jnp.dot(p.astype(jnp.bfloat16), v,
                          preferred_element_type=jnp.float32)                   # (TQ, D)  f32
            # Deferred softmax normalization: scale the (TQ, D) output, not the (TQ, L) scores.
            o_heads.append(o_h * pl.reciprocal(denom, approx=True))

        o_all = jnp.concatenate(o_heads, axis=-1).astype(jnp.bfloat16)          # (TQ, C) bf16
        # Single merged proj_out matmul (contraction K = C, not D).  Contracting dim 1 of both
        # operands gives the result directly channels-first: (C_out, TQ).
        h_cf = jax.lax.dot_general(wp_ref[...], o_all, (((1,), (1,)), ((), ())),
                                   preferred_element_type=jnp.float32)          # (C, TQ) f32

        x_res = x_ref[...]                                                      # (C, TQ) f32
        # mp_sum(x, h, t=0.3)
        o_ref[...] = (((1.0 - T_SUM) * x_res + T_SUM * h_cf) * mp_scale).astype(o_ref.dtype)

    return kernel


# ----------------------------------------------------------------------------
# Wrapper.
# ----------------------------------------------------------------------------
def _pick_tile(n, pref):
    """Largest sequence tile <= pref that divides n and is a multiple of 128 (these tiles sit on
    the lane axis of the channels-first x / output blocks); otherwise fall back to full length."""
    if n <= pref:
        return n
    t = (pref // 128) * 128
    while t >= 128:
        if n % t == 0:
            return t
        t -= 128
    return n   # TODO(synk): pad + mask ragged L instead of falling back to a full-length tile.


def _vmem_limit_bytes():
    try:
        kind = jax.devices()[0].device_kind.lower()
    except Exception:
        kind = ""
    if "v7" in kind:
        return 48 * 1024 * 1024       # v7x: 64 MiB physical VMEM per TensorCore, leave headroom
    if any(v in kind for v in ("v6", "v5", "v4")):
        return 100 * 1024 * 1024      # 128 MiB physical: raise the small scoped default
    return None                       # unknown backend: keep compiler default


def attn_block_1d_pallas(x_ncl, w_qkv, w_proj, num_heads=1, tile_q=256, tile_proj=512):
    """x_ncl: (B, C, L) channels-first; w_qkv: (3C, C, 1); w_proj: (C, C, 1)."""
    B, C, L = x_ncl.shape
    assert C % num_heads == 0
    H, D = num_heads, C // num_heads

    # --- weight prep (EDM2 weight normalization + layout), all in the wrapper ---------------
    # qkv output channel co = (h*D + d)*3 + s (s = 0/1/2 for q/k/v).  Split per q/k/v with
    # columns in (head, dim) order, then merge into one (C_in, 3C) operand: one MXU weight
    # stream; columns [0:C)=q, [C:2C)=k, [2C:3C)=v.
    w3 = mp_normalize_weight(w_qkv)[:, :, 0].reshape(H, D, 3, C)             # [h, d, s, ci]
    Wq = jnp.transpose(w3[:, :, 0, :], (2, 0, 1)).reshape(C, C)
    Wk = jnp.transpose(w3[:, :, 1, :], (2, 0, 1)).reshape(C, C)
    Wv = jnp.transpose(w3[:, :, 2, :], (2, 0, 1)).reshape(C, C)
    W3 = jnp.concatenate([Wq, Wk, Wv], axis=1).astype(jnp.bfloat16)          # (C_in, 3C)
    # proj_out kept untransposed (C_out, C_in): kernel 2 contracts its dim 1 with the channel
    # dim of the attention output, producing the tile channels-first with no explicit transpose.
    Wp = mp_normalize_weight(w_proj)[:, :, 0].astype(jnp.bfloat16)           # (C_out, C_in)

    x = x_ncl.astype(jnp.float32)                                            # residual stays f32

    TL = _pick_tile(L, tile_proj)
    TQ = _pick_tile(L, tile_q)
    vmem_limit = _vmem_limit_bytes()

    # ---- kernel 1: merged qkv projection + per-head normalization (bf16 out) ----------------
    qs, kn, vn = pl.pallas_call(
        _make_proj_kernel(C, D, H),
        out_shape=(jax.ShapeDtypeStruct((B, L, C), jnp.bfloat16),
                   jax.ShapeDtypeStruct((B, L, C), jnp.bfloat16),
                   jax.ShapeDtypeStruct((B, L, C), jnp.bfloat16)),
        grid=(B, L // TL),
        in_specs=[
            pl.BlockSpec((None, C, TL), lambda b, i: (b, 0, i)),     # x channels-first tile
            pl.BlockSpec((C, 3 * C), lambda b, i: (0, 0)),           # merged qkv weight
        ],
        out_specs=(
            pl.BlockSpec((None, TL, C), lambda b, i: (b, i, 0)),
            pl.BlockSpec((None, TL, C), lambda b, i: (b, i, 0)),
            pl.BlockSpec((None, TL, C), lambda b, i: (b, i, 0)),
        ),
        compiler_params=pltpu.CompilerParams(
            dimension_semantics=("parallel", "parallel"),
            vmem_limit_bytes=vmem_limit),
    )(x, W3)

    # ---- kernel 2: attention + merged proj_out + mp_sum residual ----------------------------
    # K/V block index is constant over the q-tile axis, so their HBM->VMEM copy is only issued
    # when the batch index changes (no per-query-tile refetch).
    # TODO(synk): for very long L, tile the KV axis with an online (flash) softmax instead of
    # materializing (TQ, L) scores.
    # TODO(synk): pipeline_mode=pl.Buffered(1) on the constant-index weight specs would reclaim
    # their second VMEM buffer on v7x's 64 MiB budget.
    out = pl.pallas_call(
        _make_attn_kernel(C, D, H),
        out_shape=jax.ShapeDtypeStruct((B, C, L), jnp.float32),
        grid=(B, L // TQ),
        in_specs=[
            pl.BlockSpec((None, C, TQ), lambda b, qt: (b, 0, qt)),   # f32 residual tile (CF)
            pl.BlockSpec((None, TQ, C), lambda b, qt: (b, qt, 0)),   # bf16 Q tile
            pl.BlockSpec((None, L, C), lambda b, qt: (b, 0, 0)),     # bf16 K (full sequence)
            pl.BlockSpec((None, L, C), lambda b, qt: (b, 0, 0)),     # bf16 V (full sequence)
            pl.BlockSpec((C, C), lambda b, qt: (0, 0)),              # proj_out weight
        ],
        out_specs=pl.BlockSpec((None, C, TQ), lambda b, qt: (b, 0, qt)),   # channels-first out
        compiler_params=pltpu.CompilerParams(
            dimension_semantics=("parallel", "parallel"),
            vmem_limit_bytes=vmem_limit),
    )(x, qs, kn, vn, Wp)

    return out


# ----------------------------------------------------------------------------
# Pure-JAX reference (channels-first, mirrors the PyTorch module) for checking.
# ----------------------------------------------------------------------------
def attn_block_1d_ref(x, w_qkv, w_proj, num_heads):
    B, C, L = x.shape
    D = C // num_heads

    def conv1x1(v, w):
        w_hat = mp_normalize_weight(w)[:, :, 0]                    # (Cout, Cin)
        return jnp.einsum('oi,bil->bol', w_hat, v)

    y = conv1x1(x, w_qkv)                                          # (B, 3C, L)
    y = y.reshape(B, num_heads, D, 3, L)
    n = jnp.sqrt(jnp.sum(y * y, axis=2, keepdims=True))
    y = y / (EPS + n * (1.0 / math.sqrt(D)))                       # normalize(y, dim=2)
    q, k, v = y[:, :, :, 0, :], y[:, :, :, 1, :], y[:, :, :, 2, :]  # (B,H,D,L)
    q, k, v = (jnp.swapaxes(t, 2, 3) for t in (q, k, v))           # (B,H,L,D)
    s = jnp.einsum('bhld,bhmd->bhlm', q, k) / math.sqrt(D)
    p = jax.nn.softmax(s, axis=-1)
    o = jnp.einsum('bhlm,bhmd->bhld', p, v)                        # (B,H,L,D)
    h = jnp.swapaxes(o, 2, 3).reshape(B, C, L)                     # 'b h l c -> b (h c) l'
    h = conv1x1(h, w_proj)
    t = T_SUM
    return ((1.0 - t) * x + t * h) / math.sqrt((1.0 - t) ** 2 + t ** 2)


if __name__ == "__main__":
    B, C, L, H = 2, 16, 16, 2

    key = jax.random.PRNGKey(0)
    kx, kq, kp = jax.random.split(key, 3)
    x = jax.random.normal(kx, (B, C, L), dtype=jnp.float32)
    w_qkv = jax.random.normal(kq, (3 * C, C, 1), dtype=jnp.float32)   # qkv weight
    w_proj = jax.random.normal(kp, (C, C, 1), dtype=jnp.float32)      # proj_out weight

    out = attn_block_1d_pallas(x, w_qkv, w_proj, num_heads=H)
    out = jax.block_until_ready(out)

    ref = attn_block_1d_ref(x, w_qkv, w_proj, num_heads=H)
    # bf16 MXU operands + approx reciprocals -> loosened tolerance vs the f32 reference.
    np.testing.assert_allclose(np.asarray(out), np.asarray(ref), rtol=5e-2, atol=5e-2)

    print("KERNEL_OK")
</pallas_src>

<mosaic_0001>
module attributes {stable_mosaic.version = 11 : i64} {
  func.func @kernel(%arg0: i32, %arg1: i32, %arg2: memref<1x16x16xf32, #tpu.memory_space<vmem>>, %arg3: memref<16x48xbf16, #tpu.memory_space<vmem>>, %arg4: memref<1x16x16xbf16, #tpu.memory_space<vmem>>, %arg5: memref<1x16x16xbf16, #tpu.memory_space<vmem>>, %arg6: memref<1x16x16xbf16, #tpu.memory_space<vmem>>) attributes {dimension_semantics = [#tpu.dimension_semantics<parallel>, #tpu.dimension_semantics<parallel>], iteration_bounds = array<i64: 2, 1>, scalar_prefetch = 0 : i64, scratch_operands = 0 : i64, tpu.core_type = #tpu.core_type<tc>, window_params = [{transform_indices = @transform_0, window_bounds = array<i64: 1, 16, 16>}, {pipeline_mode = #tpu.pipeline_mode<synchronous>, transform_indices = @transform_1, window_bounds = array<i64: 16, 48>}, {transform_indices = @transform_2, window_bounds = array<i64: 1, 16, 16>}, {transform_indices = @transform_3, window_bounds = array<i64: 1, 16, 16>}, {transform_indices = @transform_4, window_bounds = array<i64: 1, 16, 16>}]} {
    %c0 = arith.constant 0 : index
    %c0_0 = arith.constant 0 : index
    %c0_1 = arith.constant 0 : index
    %0 = vector.load %arg2[%c0, %c0_0, %c0_1] : memref<1x16x16xf32, #tpu.memory_space<vmem>>, vector<1x16x16xf32>
    %1 = vector.shape_cast %0 : vector<1x16x16xf32> to vector<16x16xf32>
    %2 = tpu.transpose %1, [1, 0] : vector<16x16xf32> -> vector<16x16xf32>
    %3 = arith.truncf %2 : vector<16x16xf32> to vector<16x16xbf16>
    %c0_2 = arith.constant 0 : index
    %c0_3 = arith.constant 0 : index
    %4 = vector.load %arg3[%c0_2, %c0_3] : memref<16x48xbf16, #tpu.memory_space<vmem>>, vector<16x48xbf16>
    %cst = arith.constant dense<0.000000e+00> : vector<16x48xf32>
    %5 = tpu.matmul %3, %4, %cst {dimension_numbers = #tpu.dot_dimension_numbers<[1], [0], [0], [1], [0, 0, 1, 1], [], []>} : vector<16x16xbf16>, vector<16x48xbf16>, vector<16x48xf32> -> vector<16x48xf32>
    %6 = vector.extract_strided_slice %5 {offsets = [0, 0], sizes = [16, 8], strides = [1, 1]} : vector<16x48xf32> to vector<16x8xf32>
    %7 = arith.mulf %6, %6 : vector<16x8xf32>
    %cst_4 = arith.constant dense<0.000000e+00> : vector<16xf32>
    %8 = vector.multi_reduction <add>, %7, %cst_4 [1] : vector<16x8xf32> to vector<16xf32>
    %9 = vector.shape_cast %8 : vector<16xf32> to vector<16x1xf32>
    %10 = math.sqrt %9 : vector<16x1xf32>
    %cst_5 = arith.constant 0.353553385 : f32
    %11 = vector.broadcast %cst_5 : f32 to vector<16x1xf32>
    %12 = arith.mulf %10, %11 : vector<16x1xf32>
    %cst_6 = arith.constant 9.99999974E-5 : f32
    %13 = vector.broadcast %cst_6 : f32 to vector<16x1xf32>
    %14 = arith.addf %13, %12 : vector<16x1xf32>
    %15 = tpu.reciprocal %14 {approx = true} : vector<16x1xf32> -> vector<16x1xf32>
    %cst_7 = arith.constant 0.353553385 : f32
    %16 = vector.broadcast %cst_7 : f32 to vector<16x1xf32>
    %17 = arith.mulf %15, %16 : vector<16x1xf32>
    %18 = vector.broadcast %17 : vector<16x1xf32> to vector<16x8xf32>
    %19 = arith.mulf %6, %18 : vector<16x8xf32>
    %20 = vector.extract_strided_slice %5 {offsets = [0, 16], sizes = [16, 8], strides = [1, 1]} : vector<16x48xf32> to vector<16x8xf32>
    %21 = arith.mulf %20, %20 : vector<16x8xf32>
    %cst_8 = arith.constant dense<0.000000e+00> : vector<16xf32>
    %22 = vector.multi_reduction <add>, %21, %cst_8 [1] : vector<16x8xf32> to vector<16xf32>
    %23 = vector.shape_cast %22 : vector<16xf32> to vector<16x1xf32>
    %24 = math.sqrt %23 : vector<16x1xf32>
    %cst_9 = arith.constant 0.353553385 : f32
    %25 = vector.broadcast %cst_9 : f32 to vector<16x1xf32>
    %26 = arith.mulf %24, %25 : vector<16x1xf32>
    %cst_10 = arith.constant 9.99999974E-5 : f32
    %27 = vector.broadcast %cst_10 : f32 to vector<16x1xf32>
    %28 = arith.addf %27, %26 : vector<16x1xf32>
    %29 = tpu.reciprocal %28 {approx = true} : vector<16x1xf32> -> vector<16x1xf32>
    %30 = vector.broadcast %29 : vector<16x1xf32> to vector<16x8xf32>
    %31 = arith.mulf %20, %30 : vector<16x8xf32>
    %32 = vector.extract_strided_slice %5 {offsets = [0, 32], sizes = [16, 8], strides = [1, 1]} : vector<16x48xf32> to vector<16x8xf32>
    %33 = arith.mulf %32, %32 : vector<16x8xf32>
    %cst_11 = arith.constant dense<0.000000e+00> : vector<16xf32>
    %34 = vector.multi_reduction <add>, %33, %cst_11 [1] : vector<16x8xf32> to vector<16xf32>
    %35 = vector.shape_cast %34 : vector<16xf32> to vector<16x1xf32>
    %36 = math.sqrt %35 : vector<16x1xf32>
    %cst_12 = arith.constant 0.353553385 : f32
    %37 = vector.broadcast %cst_12 : f32 to vector<16x1xf32>
    %38 = arith.mulf %36, %37 : vector<16x1xf32>
    %cst_13 = arith.constant 9.99999974E-5 : f32
    %39 = vector.broadcast %cst_13 : f32 to vector<16x1xf32>
    %40 = arith.addf %39, %38 : vector<16x1xf32>
    %41 = tpu.reciprocal %40 {approx = true} : vector<16x1xf32> -> vector<16x1xf32>
    %42 = vector.broadcast %41 : vector<16x1xf32> to vector<16x8xf32>
    %43 = arith.mulf %32, %42 : vector<16x8xf32>
    %44 = vector.extract_strided_slice %5 {offsets = [0, 8], sizes = [16, 8], strides = [1, 1]} : vector<16x48xf32> to vector<16x8xf32>
    %45 = arith.mulf %44, %44 : vector<16x8xf32>
    %cst_14 = arith.constant dense<0.000000e+00> : vector<16xf32>
    %46 = vector.multi_reduction <add>, %45, %cst_14 [1] : vector<16x8xf32> to vector<16xf32>
    %47 = vector.shape_cast %46 : vector<16xf32> to vector<16x1xf32>
    %48 = math.sqrt %47 : vector<16x1xf32>
    %cst_15 = arith.constant 0.353553385 : f32
    %49 = vector.broadcast %cst_15 : f32 to vector<16x1xf32>
    %50 = arith.mulf %48, %49 : vector<16x1xf32>
    %cst_16 = arith.constant 9.99999974E-5 : f32
    %51 = vector.broadcast %cst_16 : f32 to vector<16x1xf32>
    %52 = arith.addf %51, %50 : vector<16x1xf32>
    %53 = tpu.reciprocal %52 {approx = true} : vector<16x1xf32> -> vector<16x1xf32>
    %cst_17 = arith.constant 0.353553385 : f32
    %54 = vector.broadcast %cst_17 : f32 to vector<16x1xf32>
    %55 = arith.mulf %53, %54 : vector<16x1xf32>
    %56 = vector.broadcast %55 : vector<16x1xf32> to vector<16x8xf32>
    %57 = arith.mulf %44, %56 : vector<16x8xf32>
    %58 = vector.extract_strided_slice %5 {offsets = [0, 24], sizes = [16, 8], strides = [1, 1]} : vector<16x48xf32> to vector<16x8xf32>
    %59 = arith.mulf %58, %58 : vector<16x8xf32>
    %cst_18 = arith.constant dense<0.000000e+00> : vector<16xf32>
    %60 = vector.multi_reduction <add>, %59, %cst_18 [1] : vector<16x8xf32> to vector<16xf32>
    %61 = vector.shape_cast %60 : vector<16xf32> to vector<16x1xf32>
    %62 = math.sqrt %61 : vector<16x1xf32>
    %cst_19 = arith.constant 0.353553385 : f32
    %63 = vector.broadcast %cst_19 : f32 to vector<16x1xf32>
    %64 = arith.mulf %62, %63 : vector<16x1xf32>
    %cst_20 = arith.constant 9.99999974E-5 : f32
    %65 = vector.broadcast %cst_20 : f32 to vector<16x1xf32>
    %66 = arith.addf %65, %64 : vector<16x1xf32>
    %67 = tpu.reciprocal %66 {approx = true} : vector<16x1xf32> -> vector<16x1xf32>
    %68 = vector.broadcast %67 : vector<16x1xf32> to vector<16x8xf32>
    %69 = arith.mulf %58, %68 : vector<16x8xf32>
    %70 = vector.extract_strided_slice %5 {offsets = [0, 40], sizes = [16, 8], strides = [1, 1]} : vector<16x48xf32> to vector<16x8xf32>
    %71 = arith.mulf %70, %70 : vector<16x8xf32>
    %cst_21 = arith.constant dense<0.000000e+00> : vector<16xf32>
    %72 = vector.multi_reduction <add>, %71, %cst_21 [1] : vector<16x8xf32> to vector<16xf32>
    %73 = vector.shape_cast %72 : vector<16xf32> to vector<16x1xf32>
    %74 = math.sqrt %73 : vector<16x1xf32>
    %cst_22 = arith.constant 0.353553385 : f32
    %75 = vector.broadcast %cst_22 : f32 to vector<16x1xf32>
    %76 = arith.mulf %74, %75 : vector<16x1xf32>
    %cst_23 = arith.constant 9.99999974E-5 : f32
    %77 = vector.broadcast %cst_23 : f32 to vector<16x1xf32>
    %78 = arith.addf %77, %76 : vector<16x1xf32>
    %79 = tpu.reciprocal %78 {approx = true} : vector<16x1xf32> -> vector<16x1xf32>
    %80 = vector.broadcast %79 : vector<16x1xf32> to vector<16x8xf32>
    %81 = arith.mulf %70, %80 : vector<16x8xf32>
    %82 = tpu.concatenate %19, %57 in 1 : vector<16x8xf32>, vector<16x8xf32> -> vector<16x16xf32>
    %83 = arith.truncf %82 : vector<16x16xf32> to vector<16x16xbf16>
    %c0_24 = arith.constant 0 : index
    %c0_25 = arith.constant 0 : index
    %c0_26 = arith.constant 0 : index
    %84 = vector.load %arg4[%c0_24, %c0_25, %c0_26] : memref<1x16x16xbf16, #tpu.memory_space<vmem>>, vector<1x16x16xbf16>
    %85 = vector.shape_cast %84 : vector<1x16x16xbf16> to vector<16x16xbf16>
    %86 = vector.shape_cast %83 : vector<16x16xbf16> to vector<1x16x16xbf16>
    tpu.vector_store %arg4[%c0_24, %c0_25, %c0_26], %86 {strides = array<i32>} : memref<1x16x16xbf16, #tpu.memory_space<vmem>>, vector<1x16x16xbf16>,
    %87 = tpu.concatenate %31, %69 in 1 : vector<16x8xf32>, vector<16x8xf32> -> vector<16x16xf32>
    %88 = arith.truncf %87 : vector<16x16xf32> to vector<16x16xbf16>
    %c0_27 = arith.constant 0 : index
    %c0_28 = arith.constant 0 : index
    %c0_29 = arith.constant 0 : index
    %89 = vector.load %arg5[%c0_27, %c0_28, %c0_29] : memref<1x16x16xbf16, #tpu.memory_space<vmem>>, vector<1x16x16xbf16>
    %90 = vector.shape_cast %89 : vector<1x16x16xbf16> to vector<16x16xbf16>
    %91 = vector.shape_cast %88 : vector<16x16xbf16> to vector<1x16x16xbf16>
    tpu.vector_store %arg5[%c0_27, %c0_28, %c0_29], %91 {strides = array<i32>} : memref<1x16x16xbf16, #tpu.memory_space<vmem>>, vector<1x16x16xbf16>,
    %92 = tpu.concatenate %43, %81 in 1 : vector<16x8xf32>, vector<16x8xf32> -> vector<16x16xf32>
    %93 = arith.truncf %92 : vector<16x16xf32> to vector<16x16xbf16>
    %c0_30 = arith.constant 0 : index
    %c0_31 = arith.constant 0 : index
    %c0_32 = arith.constant 0 : index
    %94 = vector.load %arg6[%c0_30, %c0_31, %c0_32] : memref<1x16x16xbf16, #tpu.memory_space<vmem>>, vector<1x16x16xbf16>
    %95 = vector.shape_cast %94 : vector<1x16x16xbf16> to vector<16x16xbf16>
    %96 = vector.shape_cast %93 : vector<16x16xbf16> to vector<1x16x16xbf16>
    tpu.vector_store %arg6[%c0_30, %c0_31, %c0_32], %96 {strides = array<i32>} : memref<1x16x16xbf16, #tpu.memory_space<vmem>>, vector<1x16x16xbf16>,
    return
  }
  func.func @transform_0(%arg0: i32, %arg1: i32) -> (i32, i32, i32) {
    %c0_i32 = arith.constant 0 : i32
    %c0_i32_0 = arith.constant 0 : i32
    return %arg0, %c0_i32, %arg1 : i32, i32, i32
  }
  func.func @transform_1(%arg0: i32, %arg1: i32) -> (i32, i32) {
    %c0_i32 = arith.constant 0 : i32
    %c0_i32_0 = arith.constant 0 : i32
    %c0_i32_1 = arith.constant 0 : i32
    return %c0_i32, %c0_i32_0 : i32, i32
  }
  func.func @transform_2(%arg0: i32, %arg1: i32) -> (i32, i32, i32) {
    %c0_i32 = arith.constant 0 : i32
    %c0_i32_0 = arith.constant 0 : i32
    return %arg0, %arg1, %c0_i32 : i32, i32, i32
  }
  func.func @transform_3(%arg0: i32, %arg1: i32) -> (i32, i32, i32) {
    %c0_i32 = arith.constant 0 : i32
    %c0_i32_0 = arith.constant 0 : i32
    return %arg0, %arg1, %c0_i32 : i32, i32, i32
  }
  func.func @transform_4(%arg0: i32, %arg1: i32) -> (i32, i32, i32) {
    %c0_i32 = arith.constant 0 : i32
    %c0_i32_0 = arith.constant 0 : i32
    return %arg0, %arg1, %c0_i32 : i32, i32, i32
  }
}

</mosaic_0001>

<llo_original>
// kernel: tpu_custom_call.1
$region0: #{tpu_custom_call.1}
  #allocation0 [shape = 'u32[]', space=smem, size = 0x4, offset = 0x4, fixed_abs, tag = 'smem constant byte address 0x4 - core index']
  #allocation1 [shape = 'u32[144,128]{1,0:T(1,128)}', space=vmem, size = 0x12000, scoped, tag = 'internal scratch']
  %s0 = inlined_call_operand.hbm [shape: f32[2,16,16], index: 0, kind: input, shape index: {}]
  %s1 = inlined_call_operand.hbm [shape: bf16[16,48], index: 1, kind: input, shape index: {}]
  %s2 = inlined_call_operand.hbm [shape: bf16[2,16,16], index: 2, kind: output, shape index: {0}]
  %s3 = inlined_call_operand.hbm [shape: bf16[2,16,16], index: 3, kind: output, shape index: {1}]
  %s4 = inlined_call_operand.hbm [shape: bf16[2,16,16], index: 4, kind: output, shape index: {2}]
  %5 = xla_tuple %s2, %s3, %s4
  %s6 = sld [smem:[#allocation0]]
  $region65: #{tpu_custom_call.1} parent=0
    _
  %s8 = ssub.s32 1, %s6
  %s9 = scalar_select 0, %s8, %s6
  $region1: #{tpu_custom_call.1} parent=0
    #allocation2 [shape = 'u8[16384]{0}', space=vmem, size = 0x4000, scoped, tag = 'input window, operand 0']
    #allocation3 [shape = 's32[2]{0}', space=sflag, size = 0x8, scoped, tag = 'scoped memory for tpu_custom_call.1']
    #allocation4 [shape = 's32[2]{0}', space=sflag, size = 0x8, scoped, tag = 'scoped memory for tpu_custom_call.1']
    #allocation5 [shape = 'u8[4096]{0}', space=vmem, size = 0x1000, scoped, tag = 'input window, operand 1, single buffered']
    #allocation6 [shape = 's32[1]{0}', space=sflag, size = 0x4, scoped, tag = 'scoped memory for tpu_custom_call.1']
    #allocation7 [shape = 'u8[8192]{0}', space=vmem, size = 0x2000, scoped, tag = 'output window, operand 0']
    #allocation8 [shape = 'u8[8192]{0}', space=vmem, size = 0x2000, scoped, tag = 'output window, operand 1']
    #allocation9 [shape = 's32[2]{0}', space=sflag, size = 0x8, scoped, tag = 'scoped memory for tpu_custom_call.1']
    #allocation10 [shape = 'u8[8192]{0}', space=vmem, size = 0x2000, scoped, tag = 'output window, operand 2']
    %10 = vsyncpa [#allocation3], 0
    %s11 = scalar_lea.sflag [#allocation3], 1
    %12 = vsyncpa %s11, 0
    %13 = vsyncpa [#allocation6], 0
    %14 = vsyncpa [#allocation4], 0
    %s15 = scalar_lea.sflag [#allocation4], 1
    %16 = vsyncpa %s15, 0
    %17 = vsyncpa [#allocation9], 0
    %s18 = scalar_lea.sflag [#allocation9], 1
    %19 = vsyncpa %s18, 0
    loop: start=0, step=1, limit=4
    $region2: #{tpu_custom_call.1} parent=1 // loop_pre_header
      _
    $region3: #{tpu_custom_call.1} parent=1 // loop_header
      %s21 = sphi 0, %s25
      %p22 = scmp.ge.s32.totalorder %s21, 4
      %s28 = sphi 0, %s40
      %s29 = sphi 0, %s36
      %s30 = sphi 0, %s28
      %s31 = sphi 0, %s29
      %s32 = sphi 0, %s30
      %s33 = sphi 0, %s31
      %s45 = sphi 0, %s47
      %s48 = sphi 0, %s45
      %s49 = sphi 0, %s48
      %s65 = sphi 0, %s49
      %s69 = sphi 0, %s69
      %s71 = sphi 0, %s69
      %s72 = sphi 0, %s71
      %s86 = sphi 0, %s72
      %s94 = sphi 0, %s96
      %s97 = sphi 0, %s94
      %s98 = sphi 0, %s97
      %s114 = sphi 0, %s98
      %s122 = sphi 0, %s124
      %s125 = sphi 0, %s122
      %s126 = sphi 0, %s125
      %s142 = sphi 0, %s126
      %s150 = sphi 0, %s152
      %s153 = sphi 0, %s150
      %s154 = sphi 0, %s153
      %s170 = sphi 0, %s154
    $region4: #{tpu_custom_call.1} parent=1 // loop_header_branch
      %24 = sbr.rel (%p22) target = $region8
    $region5: #{tpu_custom_call.1} parent=1 // loop_body
      %s26 = ssub.s32 %s21, 1
      %s27 = ssub.s32 %s21, 2
      %s34 = sadd.s32 1, %s29
      %p35 = scmp.ge.s32.totalorder %s34, 1
      %s36 = scalar_select %p35, 0, %s34
      %s37 = sadd.s32 1, %s28
      %s38 = scalar_select %p35, %s37, %s28
      %p39 = scmp.ge.s32.totalorder %s38, 2
      %s40 = scalar_select %p39, 0, %s38
      %s41 = ssub.s32 %s28, %s40
      %s42 = ssub.s32 %s29, %s36
      %s43 = sor.u32 %s41, %s42
      %p44 = scmp.eq.s32.totalorder %s43, 0
      %s46 = sadd.s32 %s45, 1
      %s47 = scalar_select %p44, %s45, %s46
      %p50 = pneg %p44
      %p51 = scmp.eq.s32.totalorder %s21, 1
      %p52 = por %p50, %p51
      %p53 = scmp.ne.s32.totalorder %s45, %s48
      %p54 = scmp.eq.s32.totalorder %s21, 0
      %p55 = por %p53, %p54
      %p56 = scmp.ne.s32.totalorder %s45, %s48
      %p57 = scmp.eq.s32.totalorder %s26, 1
      %p58 = por %p56, %p57
      %p59 = scmp.ne.s32.totalorder %s48, %s49
      %p60 = scmp.eq.s32.totalorder %s26, 0
      %p61 = por %p59, %p60
      %p62 = scmp.ne.s32.totalorder %s48, %s49
      %p63 = scmp.eq.s32.totalorder %s27, 1
      %p64 = por %p62, %p63
      %p66 = scmp.ne.s32.totalorder %s49, %s65
      %p67 = scmp.eq.s32.totalorder %s27, 0
      %p68 = por %p66, %p67
      %s70 = sadd.s32 %s69, 1
      %p73 = scmp.eq.s32.totalorder %s21, 1
      %p74 = scmp.ne.s32.totalorder %s69, %s71
      %p75 = scmp.eq.s32.totalorder %s21, 0
      %p76 = por %p74, %p75
      %p77 = scmp.ne.s32.totalorder %s69, %s71
      %p78 = scmp.eq.s32.totalorder %s26, 1
      %p79 = por %p77, %p78
      %p80 = scmp.ne.s32.totalorder %s71, %s72
      %p81 = scmp.eq.s32.totalorder %s26, 0
      %p82 = por %p80, %p81
      %p83 = scmp.ne.s32.totalorder %s71, %s72
      %p84 = scmp.eq.s32.totalorder %s27, 1
      %p85 = por %p83, %p84
      %p87 = scmp.ne.s32.totalorder %s72, %s86
      %p88 = scmp.eq.s32.totalorder %s27, 0
      %p89 = por %p87, %p88
      %s90 = ssub.s32 %s28, %s40
      %s91 = ssub.s32 %s29, %s36
      %s92 = sor.u32 %s90, %s91
      %p93 = scmp.eq.s32.totalorder %s92, 0
      %s95 = sadd.s32 %s94, 1
      %s96 = scalar_select %p93, %s94, %s95
      %p99 = pneg %p93
      %p100 = scmp.eq.s32.totalorder %s21, 1
      %p101 = por %p99, %p100
      %p102 = scmp.ne.s32.totalorder %s94, %s97
      %p103 = scmp.eq.s32.totalorder %s21, 0
      %p104 = por %p102, %p103
      %p105 = scmp.ne.s32.totalorder %s94, %s97
      %p106 = scmp.eq.s32.totalorder %s26, 1
      %p107 = por %p105, %p106
      %p108 = scmp.ne.s32.totalorder %s97, %s98
      %p109 = scmp.eq.s32.totalorder %s26, 0
      %p110 = por %p108, %p109
      %p111 = scmp.ne.s32.totalorder %s97, %s98
      %p112 = scmp.eq.s32.totalorder %s27, 1
      %p113 = por %p111, %p112
      %p115 = scmp.ne.s32.totalorder %s98, %s114
      %p116 = scmp.eq.s32.totalorder %s27, 0
      %p117 = por %p115, %p116
      %s118 = ssub.s32 %s28, %s40
      %s119 = ssub.s32 %s29, %s36
      %s120 = sor.u32 %s118, %s119
      %p121 = scmp.eq.s32.totalorder %s120, 0
      %s123 = sadd.s32 %s122, 1
      %s124 = scalar_select %p121, %s122, %s123
      %p127 = pneg %p121
      %p128 = scmp.eq.s32.totalorder %s21, 1
      %p129 = por %p127, %p128
      %p130 = scmp.ne.s32.totalorder %s122, %s125
      %p131 = scmp.eq.s32.totalorder %s21, 0
      %p132 = por %p130, %p131
      %p133 = scmp.ne.s32.totalorder %s122, %s125
      %p134 = scmp.eq.s32.totalorder %s26, 1
      %p135 = por %p133, %p134
      %p136 = scmp.ne.s32.totalorder %s125, %s126
      %p137 = scmp.eq.s32.totalorder %s26, 0
      %p138 = por %p136, %p137
      %p139 = scmp.ne.s32.totalorder %s125, %s126
      %p140 = scmp.eq.s32.totalorder %s27, 1
      %p141 = por %p139, %p140
      %p143 = scmp.ne.s32.totalorder %s126, %s142
      %p144 = scmp.eq.s32.totalorder %s27, 0
      %p145 = por %p143, %p144
      %s146 = ssub.s32 %s28, %s40
      %s147 = ssub.s32 %s29, %s36
      %s148 = sor.u32 %s146, %s147
      %p149 = scmp.eq.s32.totalorder %s148, 0
      %s151 = sadd.s32 %s150, 1
      %s152 = scalar_select %p149, %s150, %s151
      %p155 = pneg %p149
      %p156 = scmp.eq.s32.totalorder %s21, 1
      %p157 = por %p155, %p156
      %p158 = scmp.ne.s32.totalorder %s150, %s153
      %p159 = scmp.eq.s32.totalorder %s21, 0
      %p160 = por %p158, %p159
      %p161 = scmp.ne.s32.totalorder %s150, %s153
      %p162 = scmp.eq.s32.totalorder %s26, 1
      %p163 = por %p161, %p162
      %p164 = scmp.ne.s32.totalorder %s153, %s154
      %p165 = scmp.eq.s32.totalorder %s26, 0
      %p166 = por %p164, %p165
      %p167 = scmp.ne.s32.totalorder %s153, %s154
      %p168 = scmp.eq.s32.totalorder %s27, 1
      %p169 = por %p167, %p168
      %p171 = scmp.ne.s32.totalorder %s154, %s170
      %p172 = scmp.eq.s32.totalorder %s27, 0
      %p173 = por %p171, %p172
      %p174 = scmp.le.s32.totalorder 1, %s21
      %p175 = scmp.lt.s32.totalorder %s21, 3
      %p176 = pnand %p174, %p175
      %p177 = pneg %p176
      // Predicated region
      $region9: #{tpu_custom_call.1} parent=5 // pred_check
        _
      $region10: #{tpu_custom_call.1} parent=5 // pred_check_branch
        %179 = sbr.rel (%p176) target = $region12
      $region11: #{tpu_custom_call.1} parent=5 // pred_region
        %s180 = ssub.s32 %s21, 1
        // Predicated region
        $region13: #{tpu_custom_call.1} parent=11 // pred_check
          %p181 = pneg %p82
        $region14: #{tpu_custom_call.1} parent=11 // pred_check_branch
          %183 = sbr.rel (%p181) target = $region16
        $region15: #{tpu_custom_call.1} parent=11 // pred_region
          %s185 = ssub.s32 128, 128
          %186 = vsyncadd [#allocation6], %s185
          %s187 = sshll.u32 [#allocation5], 4
          %s188 = int_to_ptr.vmem [resolvable:$true] %s187
          %193 = dma.hbm_to_vmem [thread:$0]  %s1, 128, %s188, [#allocation6], 64, 64, 4
        $region16: #{tpu_custom_call.1} parent=11 // pred_fallthru
          _
      $region12: #{tpu_custom_call.1} parent=5 // pred_fallthru
        _
      %p194 = scmp.lt.s32.totalorder %s21, 2
      // Predicated region
      $region17: #{tpu_custom_call.1} parent=5 // pred_check
        %p195 = pneg %p194
      $region18: #{tpu_custom_call.1} parent=5 // pred_check_branch
        %197 = sbr.rel (%p195) target = $region20
      $region19: #{tpu_custom_call.1} parent=5 // pred_region
        // Predicated region
        $region21: #{tpu_custom_call.1} parent=19 // pred_check
          %p198 = pneg %p55
        $region22: #{tpu_custom_call.1} parent=19 // pred_check_branch
          %200 = sbr.rel (%p198) target = $region24
        $region23: #{tpu_custom_call.1} parent=19 // pred_region
          %s201 = sand.u32 %s45, 1
          %s202 = scalar_lea.sflag [#allocation3], %s201
          %s203 = sand.u32 %s45, 1
          %s204 = smul.addr %s203, 16
          %s205 = scalar_lea.vmem [#allocation2], %s204
          %s207 = ssub.s32 256, 256
          %208 = vsyncadd %s202, %s207
          %s209 = smul.addr %s28, 2
          %s210 = sadd.s32 %s29, %s209
          %s211 = smul.addr %s210, 128
          %s212 = scalar_lea.hbm %s0, %s211
          %s213 = sshll.u32 %s205, 4
          %s214 = int_to_ptr.vmem [resolvable:$true] %s213
          %219 = dma.hbm_to_vmem [thread:$0]  %s212, 256, %s214, %s202, 128, 128, 8
        $region24: #{tpu_custom_call.1} parent=19 // pred_fallthru
          _
      $region20: #{tpu_custom_call.1} parent=5 // pred_fallthru
        _
      %p220 = scmp.le.s32.totalorder 1, %s21
      %p221 = scmp.lt.s32.totalorder %s21, 3
      %p222 = pnand %p220, %p221
      %p223 = pneg %p222
      // Predicated region
      $region25: #{tpu_custom_call.1} parent=5 // pred_check
        _
      $region26: #{tpu_custom_call.1} parent=5 // pred_check_branch
        %225 = sbr.rel (%p222) target = $region28
      $region27: #{tpu_custom_call.1} parent=5 // pred_region
        %s226 = ssub.s32 %s21, 1
        %s227 = sand.u32 %s48, 1
        %s228 = scalar_lea.sflag [#allocation3], %s227
        %s229 = sand.u32 %s48, 1
        %s230 = smul.addr %s229, 16
        %s231 = scalar_lea.vmem [#allocation2], %s230
        // Predicated region
        $region29: #{tpu_custom_call.1} parent=27 // pred_check
          %p232 = pneg %p61
        $region30: #{tpu_custom_call.1} parent=27 // pred_check_branch
          %234 = sbr.rel (%p232) target = $region32
        $region31: #{tpu_custom_call.1} parent=27 // pred_region
          %235 = dma.done %s228, 256
        $region32: #{tpu_custom_call.1} parent=27 // pred_fallthru
          _
        // Predicated region
        $region33: #{tpu_custom_call.1} parent=27 // pred_check
          %p236 = pneg %p82
        $region34: #{tpu_custom_call.1} parent=27 // pred_check_branch
          %238 = sbr.rel (%p236) target = $region36
        $region35: #{tpu_custom_call.1} parent=27 // pred_region
          %239 = dma.done [#allocation6], 128
        $region36: #{tpu_custom_call.1} parent=27 // pred_fallthru
          _
        %s240 = sand.u32 %s48, 1
        %s241 = scalar_lea.sflag [#allocation3], %s240
        %s242 = sand.u32 %s48, 1
        %s243 = smul.addr %s242, 16
        %s244 = scalar_lea.vmem [#allocation2], %s243
        %p245 = pneg %p61
        %p246 = pneg %p58
        %p247 = pneg %p82
        %p248 = pneg %p79
        %p249 = pneg %p110
        %p250 = pneg %p107
        %s251 = sand.u32 %s97, 1
        %s252 = scalar_lea.sflag [#allocation4], %s251
        %s253 = sand.u32 %s97, 1
        %s254 = smul.addr %s253, 8
        %s255 = scalar_lea.vmem [#allocation7], %s254
        %p256 = pneg %p138
        %p257 = pneg %p135
        %s258 = sand.u32 %s26, 1
        %s259 = scalar_lea.sflag [#allocation9], %s258
        %s260 = sand.u32 %s125, 1
        %s261 = smul.addr %s260, 8
        %s262 = scalar_lea.vmem [#allocation8], %s261
        %p263 = pneg %p166
        %p264 = pneg %p163
        %s265 = sand.u32 %s26, 1
        %s266 = scalar_lea.sflag [#allocation9], %s265
        %s267 = sand.u32 %s153, 1
        %s268 = smul.addr %s267, 8
        %s269 = scalar_lea.vmem [#allocation10], %s268
        %s270 = smul.u32 2, %s31
        %s271 = smul.u32 2, %s31
        %s272 = smul.u32 2, %s31
        %v274 = vld [vmem:[%s231] sm:$0xff]
        %v275 = vld [vmem:[%s231 + $0x8] sm:$0xff]
        %276 = vxpose.xlu0.b32.start [1/16] %v274, 128
        %277 = vxpose.xlu0.b32.cont [2/16] %v275, 128
        %278 = vxpose.xlu0.b32.cont [3/16] 0.0, 128
        %279 = vxpose.xlu0.b32.cont [4/16] 0.0, 128
        %280 = vxpose.xlu0.b32.cont [5/16] 0.0, 128
        %281 = vxpose.xlu0.b32.cont [6/16] 0.0, 128
        %282 = vxpose.xlu0.b32.cont [7/16] 0.0, 128
        %283 = vxpose.xlu0.b32.cont [8/16] 0.0, 128
        %284 = vxpose.xlu0.b32.cont [9/16] 0.0, 128
        %285 = vxpose.xlu0.b32.cont [10/16] 0.0, 128
        %286 = vxpose.xlu0.b32.cont [11/16] 0.0, 128
        %287 = vxpose.xlu0.b32.cont [12/16] 0.0, 128
        %288 = vxpose.xlu0.b32.cont [13/16] 0.0, 128
        %289 = vxpose.xlu0.b32.cont [14/16] 0.0, 128
        %290 = vxpose.xlu0.b32.cont [15/16] 0.0, 128
        %291 = vxpose.xlu0.b32.end [16/16] 0.0, 128
        %v292 = vpop.trf.xlu0
        %v293 = vpop.trf.xlu0
        %v294 = vpop.trf.xlu0
        %v295 = vpop.trf.xlu0
        %v296 = vpop.trf.xlu0
        %v297 = vpop.trf.xlu0
        %v298 = vpop.trf.xlu0
        %v299 = vpop.trf.xlu0
        %v300 = vpop.trf.xlu0
        %v301 = vpop.trf.xlu0
        %v302 = vpop.trf.xlu0
        %v303 = vpop.trf.xlu0
        %v304 = vpop.trf.xlu0
        %v305 = vpop.trf.xlu0
        %v306 = vpop.trf.xlu0
        %v307 = vpop.trf.xlu0
        %v308 = vpack.c.bf16 %v293, %v292
        %v309 = vld [vmem:[#allocation5] sm:$0xf]
        %v310 = vld [vmem:[#allocation5 + $0x4] sm:$0xf]
        %v313 = vunpack.c.l.b16 %v309
        %v314 = vunpack.c.l.b16 %v310
        %v315 = vpack.c.b16 %v314, %v313
        %vm317 = vcmask 130048
        %v319 = vsel %vm317, %v308, 0
        %321 = vmatprep.subr.bf16.mxu0 0
        %322 = vmatpush1.bf16.msra.mxu0 %v315
        %323 = vmatprep.subr.bf16.mxu0 0
        %324 = vmatpush1.bf16.msra.mxu0 0
        %325 = vmatprep.subr.bf16.mxu0 0
        %326 = vmatpush1.bf16.msra.mxu0 0
        %327 = vmatprep.subr.bf16.mxu0 0
        %328 = vmatpush1.bf16.msra.mxu0 0
        %329 = vmatprep.subr.bf16.mxu0 0
        %330 = vmatpush1.bf16.msra.mxu0 0
        %331 = vmatprep.subr.bf16.mxu0 0
        %332 = vmatpush1.bf16.msra.mxu0 0
        %333 = vmatprep.subr.bf16.mxu0 0
        %334 = vmatpush1.bf16.msra.mxu0 0
        %335 = vmatprep.subr.bf16.mxu0 0
        %336 = vmatpush1.bf16.msra.mxu0 0
        %337 = vmatprep.subr.bf16.mxu0 0
        %338 = vmatpush1.bf16.msra.mxu0 0
        %339 = vmatprep.subr.bf16.mxu0 0
        %340 = vmatpush1.bf16.msra.mxu0 0
        %341 = vmatprep.subr.bf16.mxu0 0
        %342 = vmatpush1.bf16.msra.mxu0 0
        %343 = vmatprep.subr.bf16.mxu0 0
        %344 = vmatpush1.bf16.msra.mxu0 0
        %345 = vmatprep.subr.bf16.mxu0 0
        %346 = vmatpush1.bf16.msra.mxu0 0
        %347 = vmatprep.subr.bf16.mxu0 0
        %348 = vmatpush1.bf16.msra.mxu0 0
        %349 = vmatprep.subr.bf16.mxu0 0
        %350 = vmatpush1.bf16.msra.mxu0 0
        %351 = vmatprep.subr.bf16.mxu0 0
        %352 = vmatpush1.bf16.msra.mxu0 0
        %353 = vmatprep.mubr.bf16.mxu0 0
        %354 = vmatmul.mubr.bf16.gmra.mrb[0].mxu0 %v319
        %v355 = vpop.f32.mrb[0].mxu0
        %v356 = vadd.f32 0.0, %v355
        %v357 = vpop.f32.mrb[0].mxu0
        %v358 = vpop.f32.mrb[0].mxu0
        %v359 = vadd.f32 0.0, %v358
        %v360 = vpop.f32.mrb[0].mxu0
        %361 = vdwg.mxu0
        %v362 = vmul.f32 %v356, %v356
        %v363 = vmul.f32 %v359, %v359
        %vm364 = vcmask 64512
        %v365 = vsel %vm364, %v362, 0.0
        %366 = vadd.xlane.f32.xlu0 %v365
        %v367 = vpop.xlane.xlu0 %366
        %v368 = vsel %vm364, %v363, 0.0
        %369 = vadd.xlane.f32.xlu0 %v368
        %v370 = vpop.xlane.xlu0 %369
        %v371 = vrsqrt.pop %v367
        %v372 = vmul.f32 %v367, %v371
        %vm373 = vcmp.eq.f32.partialorder %v367, inf
        %v374 = vsel %vm373, %v367, %v372
        %vm375 = vcmp.eq.f32.partialorder %v367, 0.0
        %v376 = vand.u32 %v367, 2147483648
        %v377 = vsel %vm375, %v376, %v374
        %v378 = vrsqrt.pop %v370
        %v379 = vmul.f32 %v370, %v378
        %vm380 = vcmp.eq.f32.partialorder %v370, inf
        %v381 = vsel %vm380, %v370, %v379
        %vm382 = vcmp.eq.f32.partialorder %v370, 0.0
        %v383 = vand.u32 %v370, 2147483648
        %v384 = vsel %vm382, %v383, %v381
        %v385 = vmul.f32 %v377, 0.35355338
        %v386 = vmul.f32 %v384, 0.35355338
        %v387 = vadd.f32 %v385, 0.0001
        %v388 = vadd.f32 %v386, 0.0001
        %v389 = vrcp.pop %v387
        %v390 = vrcp.pop %v388
        %v391 = vmul.f32 %v389, 0.35355338
        %v392 = vmul.f32 %v390, 0.35355338
        %v393 = vmul.f32 %v356, %v391
        %v394 = vmul.f32 %v359, %v392
        %397 = vrot.lane.b32.xlu0 %v362, 112
        %v398 = vpop.permute.xlu0 %397
        %399 = vrot.lane.b32.xlu0 %v363, 112
        %v400 = vpop.permute.xlu0 %399
        %v403 = vsel %vm364, %v398, 0.0
        %404 = vadd.xlane.f32.xlu0 %v403
        %v405 = vpop.xlane.xlu0 %404
        %v406 = vsel %vm364, %v400, 0.0
        %407 = vadd.xlane.f32.xlu0 %v406
        %v408 = vpop.xlane.xlu0 %407
        %v409 = vrsqrt.pop %v405
        %v410 = vmul.f32 %v405, %v409
        %vm411 = vcmp.eq.f32.partialorder %v405, inf
        %v412 = vsel %vm411, %v405, %v410
        %vm413 = vcmp.eq.f32.partialorder %v405, 0.0
        %v414 = vand.u32 %v405, 2147483648
        %v415 = vsel %vm413, %v414, %v412
        %v416 = vrsqrt.pop %v408
        %v417 = vmul.f32 %v408, %v416
        %vm418 = vcmp.eq.f32.partialorder %v408, inf
        %v419 = vsel %vm418, %v408, %v417
        %vm420 = vcmp.eq.f32.partialorder %v408, 0.0
        %v421 = vand.u32 %v408, 2147483648
        %v422 = vsel %vm420, %v421, %v419
        %v423 = vmul.f32 %v415, 0.35355338
        %v424 = vmul.f32 %v422, 0.35355338
        %v425 = vadd.f32 %v423, 0.0001
        %v426 = vadd.f32 %v424, 0.0001
        %v427 = vrcp.pop %v425
        %v428 = vrcp.pop %v426
        %v429 = vmul.f32 %v356, %v427
        %v430 = vmul.f32 %v359, %v428
        %431 = vrot.lane.b32.xlu0 %v362, 96
        %v432 = vpop.permute.xlu0 %431
        %433 = vrot.lane.b32.xlu0 %v363, 96
        %v434 = vpop.permute.xlu0 %433
        %v437 = vsel %vm364, %v432, 0.0
        %438 = vadd.xlane.f32.xlu0 %v437
        %v439 = vpop.xlane.xlu0 %438
        %v440 = vsel %vm364, %v434, 0.0
        %441 = vadd.xlane.f32.xlu0 %v440
        %v442 = vpop.xlane.xlu0 %441
        %v443 = vrsqrt.pop %v439
        %v444 = vmul.f32 %v439, %v443
        %vm445 = vcmp.eq.f32.partialorder %v439, inf
        %v446 = vsel %vm445, %v439, %v444
        %vm447 = vcmp.eq.f32.partialorder %v439, 0.0
        %v448 = vand.u32 %v439, 2147483648
        %v449 = vsel %vm447, %v448, %v446
        %v450 = vrsqrt.pop %v442
        %v451 = vmul.f32 %v442, %v450
        %vm452 = vcmp.eq.f32.partialorder %v442, inf
        %v453 = vsel %vm452, %v442, %v451
        %vm454 = vcmp.eq.f32.partialorder %v442, 0.0
        %v455 = vand.u32 %v442, 2147483648
        %v456 = vsel %vm454, %v455, %v453
        %v457 = vmul.f32 %v449, 0.35355338
        %v458 = vmul.f32 %v456, 0.35355338
        %v459 = vadd.f32 %v457, 0.0001
        %v460 = vadd.f32 %v458, 0.0001
        %v461 = vrcp.pop %v459
        %v462 = vrcp.pop %v460
        %v463 = vmul.f32 %v356, %v461
        %v464 = vmul.f32 %v359, %v462
        %465 = vrot.lane.b32.xlu0 %v362, 120
        %v466 = vpop.permute.xlu0 %465
        %467 = vrot.lane.b32.xlu0 %v363, 120
        %v468 = vpop.permute.xlu0 %467
        %v471 = vsel %vm364, %v466, 0.0
        %472 = vadd.xlane.f32.xlu0 %v471
        %v473 = vpop.xlane.xlu0 %472
        %v474 = vsel %vm364, %v468, 0.0
        %475 = vadd.xlane.f32.xlu0 %v474
        %v476 = vpop.xlane.xlu0 %475
        %v477 = vrsqrt.pop %v473
        %v478 = vmul.f32 %v473, %v477
        %vm479 = vcmp.eq.f32.partialorder %v473, inf
        %v480 = vsel %vm479, %v473, %v478
        %vm481 = vcmp.eq.f32.partialorder %v473, 0.0
        %v482 = vand.u32 %v473, 2147483648
        %v483 = vsel %vm481, %v482, %v480
        %v484 = vrsqrt.pop %v476
        %v485 = vmul.f32 %v476, %v484
        %vm486 = vcmp.eq.f32.partialorder %v476, inf
        %v487 = vsel %vm486, %v476, %v485
        %vm488 = vcmp.eq.f32.partialorder %v476, 0.0
        %v489 = vand.u32 %v476, 2147483648
        %v490 = vsel %vm488, %v489, %v487
        %v491 = vmul.f32 %v483, 0.35355338
        %v492 = vmul.f32 %v490, 0.35355338
        %v493 = vadd.f32 %v491, 0.0001
        %v494 = vadd.f32 %v492, 0.0001
        %v495 = vrcp.pop %v493
        %v496 = vrcp.pop %v494
        %v497 = vmul.f32 %v495, 0.35355338
        %v498 = vmul.f32 %v496, 0.35355338
        %v499 = vmul.f32 %v356, %v497
        %v500 = vmul.f32 %v359, %v498
        %501 = vrot.lane.b32.xlu0 %v362, 104
        %v502 = vpop.permute.xlu0 %501
        %503 = vrot.lane.b32.xlu0 %v363, 104
        %v504 = vpop.permute.xlu0 %503
        %v507 = vsel %vm364, %v502, 0.0
        %508 = vadd.xlane.f32.xlu0 %v507
        %v509 = vpop.xlane.xlu0 %508
        %v510 = vsel %vm364, %v504, 0.0
        %511 = vadd.xlane.f32.xlu0 %v510
        %v512 = vpop.xlane.xlu0 %511
        %v513 = vrsqrt.pop %v509
        %v514 = vmul.f32 %v509, %v513
        %vm515 = vcmp.eq.f32.partialorder %v509, inf
        %v516 = vsel %vm515, %v509, %v514
        %vm517 = vcmp.eq.f32.partialorder %v509, 0.0
        %v518 = vand.u32 %v509, 2147483648
        %v519 = vsel %vm517, %v518, %v516
        %v520 = vrsqrt.pop %v512
        %v521 = vmul.f32 %v512, %v520
        %vm522 = vcmp.eq.f32.partialorder %v512, inf
        %v523 = vsel %vm522, %v512, %v521
        %vm524 = vcmp.eq.f32.partialorder %v512, 0.0
        %v525 = vand.u32 %v512, 2147483648
        %v526 = vsel %vm524, %v525, %v523
        %v527 = vmul.f32 %v519, 0.35355338
        %v528 = vmul.f32 %v526, 0.35355338
        %v529 = vadd.f32 %v527, 0.0001
        %v530 = vadd.f32 %v528, 0.0001
        %v531 = vrcp.pop %v529
        %v532 = vrcp.pop %v530
        %v533 = vmul.f32 %v356, %v531
        %v534 = vmul.f32 %v359, %v532
        %535 = vrot.lane.b32.xlu0 %v362, 88
        %v536 = vpop.permute.xlu0 %535
        %537 = vrot.lane.b32.xlu0 %v363, 88
        %v538 = vpop.permute.xlu0 %537
        %v541 = vsel %vm364, %v536, 0.0
        %542 = vadd.xlane.f32.xlu0 %v541
        %v543 = vpop.xlane.xlu0 %542
        %v544 = vsel %vm364, %v538, 0.0
        %545 = vadd.xlane.f32.xlu0 %v544
        %v546 = vpop.xlane.xlu0 %545
        %v547 = vrsqrt.pop %v543
        %v548 = vmul.f32 %v543, %v547
        %vm549 = vcmp.eq.f32.partialorder %v543, inf
        %v550 = vsel %vm549, %v543, %v548
        %vm551 = vcmp.eq.f32.partialorder %v543, 0.0
        %v552 = vand.u32 %v543, 2147483648
        %v553 = vsel %vm551, %v552, %v550
        %v554 = vrsqrt.pop %v546
        %v555 = vmul.f32 %v546, %v554
        %vm556 = vcmp.eq.f32.partialorder %v546, inf
        %v557 = vsel %vm556, %v546, %v555
        %vm558 = vcmp.eq.f32.partialorder %v546, 0.0
        %v559 = vand.u32 %v546, 2147483648
        %v560 = vsel %vm558, %v559, %v557
        %v561 = vmul.f32 %v553, 0.35355338
        %v562 = vmul.f32 %v560, 0.35355338
        %v563 = vadd.f32 %v561, 0.0001
        %v564 = vadd.f32 %v562, 0.0001
        %v565 = vrcp.pop %v563
        %v566 = vrcp.pop %v564
        %v567 = vmul.f32 %v356, %v565
        %v568 = vmul.f32 %v359, %v566
        %v569 = vsel %vm364, %v393, %v499
        %v570 = vsel %vm364, %v394, %v500
        %v571 = vpack.c.bf16 %v570, %v569
        %v573 = vunpack.c.l.b16 %v571
        %v574 = vunpack.c.h.b16 %v571
        %v575 = vpack.c.b16 %v573, %v573
        %v576 = vpack.c.b16 %v574, %v574
        %vm579 = vcmask 125952
        %580 = vst.msk [vmem:[%s255] sm:$0xf] %vm579, %v575
        %581 = vst.msk [vmem:[%s255 + $0x4] sm:$0xf] %vm579, %v576
        %584 = vrot.lane.b32.xlu0 %v429, 112
        %v585 = vpop.permute.xlu0 %584
        %586 = vrot.lane.b32.xlu0 %v430, 112
        %v587 = vpop.permute.xlu0 %586
        %592 = vrot.lane.b32.xlu0 %v533, 112
        %v593 = vpop.permute.xlu0 %592
        %594 = vrot.lane.b32.xlu0 %v534, 112
        %v595 = vpop.permute.xlu0 %594
        %v598 = vsel %vm364, %v585, %v593
        %v599 = vsel %vm364, %v587, %v595
        %v600 = vpack.c.bf16 %v599, %v598
        %v602 = vunpack.c.l.b16 %v600
        %v603 = vunpack.c.h.b16 %v600
        %v604 = vpack.c.b16 %v602, %v602
        %v605 = vpack.c.b16 %v603, %v603
        %608 = vst.msk [vmem:[%s262] sm:$0xf] %vm579, %v604
        %609 = vst.msk [vmem:[%s262 + $0x4] sm:$0xf] %vm579, %v605
        %612 = vrot.lane.b32.xlu0 %v463, 96
        %v613 = vpop.permute.xlu0 %612
        %614 = vrot.lane.b32.xlu0 %v464, 96
        %v615 = vpop.permute.xlu0 %614
        %620 = vrot.lane.b32.xlu0 %v567, 96
        %v621 = vpop.permute.xlu0 %620
        %622 = vrot.lane.b32.xlu0 %v568, 96
        %v623 = vpop.permute.xlu0 %622
        %v626 = vsel %vm364, %v613, %v621
        %v627 = vsel %vm364, %v615, %v623
        %v628 = vpack.c.bf16 %v627, %v626
        %v630 = vunpack.c.l.b16 %v628
        %v631 = vunpack.c.h.b16 %v628
        %v632 = vpack.c.b16 %v630, %v630
        %v633 = vpack.c.b16 %v631, %v631
        %636 = vst.msk [vmem:[%s269] sm:$0xf] %vm579, %v632
        %637 = vst.msk [vmem:[%s269 + $0x4] sm:$0xf] %vm579, %v633
        %s638 = sand.u32 %s97, 1
        %s639 = scalar_lea.sflag [#allocation4], %s638
        %s640 = sand.u32 %s97, 1
        %s641 = smul.addr %s640, 8
        %s642 = scalar_lea.vmem [#allocation7], %s641
        %s643 = sand.u32 %s26, 1
        %s644 = scalar_lea.sflag [#allocation9], %s643
        %s645 = sand.u32 %s125, 1
        %s646 = smul.addr %s645, 8
        %s647 = scalar_lea.vmem [#allocation8], %s646
        %s648 = sand.u32 %s26, 1
        %s649 = scalar_lea.sflag [#allocation9], %s648
        %s650 = sand.u32 %s153, 1
        %s651 = smul.addr %s650, 8
        %s652 = scalar_lea.vmem [#allocation10], %s651
        // Predicated region
        $region37: #{tpu_custom_call.1} parent=27 // pred_check
          %p653 = pneg %p107
        $region38: #{tpu_custom_call.1} parent=27 // pred_check_branch
          %655 = sbr.rel (%p653) target = $region40
        $region39: #{tpu_custom_call.1} parent=27 // pred_region
          %s656 = smul.u32 2, %s31
          %s658 = ssub.s32 128, 128
          %659 = vsyncadd %s639, %s658
          %s660 = smul.addr %s30, 2
          %s661 = sadd.s32 %s656, %s660
          %s662 = smul.addr %s661, 64
          %s663 = scalar_lea.hbm %s2, %s662
          %s664 = sshll.u32 %s642, 4
          %s665 = int_to_ptr.vmem [resolvable:$true] %s664
          %670 = dma.vmem_to_hbm [thread:$0]  %s665, 128, %s663, %s639, 64, 64, 4
        $region40: #{tpu_custom_call.1} parent=27 // pred_fallthru
          _
        // Predicated region
        $region41: #{tpu_custom_call.1} parent=27 // pred_check
          %p671 = pneg %p135
        $region42: #{tpu_custom_call.1} parent=27 // pred_check_branch
          %673 = sbr.rel (%p671) target = $region44
        $region43: #{tpu_custom_call.1} parent=27 // pred_region
          %s674 = smul.u32 2, %s31
          %s676 = ssub.s32 128, 128
          %677 = vsyncadd %s644, %s676
          %s678 = smul.addr %s30, 2
          %s679 = sadd.s32 %s674, %s678
          %s680 = smul.addr %s679, 64
          %s681 = scalar_lea.hbm %s3, %s680
          %s682 = sshll.u32 %s647, 4
          %s683 = int_to_ptr.vmem [resolvable:$true] %s682
          %688 = dma.vmem_to_hbm [thread:$0]  %s683, 128, %s681, %s644, 64, 64, 4
        $region44: #{tpu_custom_call.1} parent=27 // pred_fallthru
          _
        // Predicated region
        $region45: #{tpu_custom_call.1} parent=27 // pred_check
          %p689 = pneg %p163
        $region46: #{tpu_custom_call.1} parent=27 // pred_check_branch
          %691 = sbr.rel (%p689) target = $region48
        $region47: #{tpu_custom_call.1} parent=27 // pred_region
          %s692 = smul.u32 2, %s31
          %s694 = ssub.s32 128, 128
          %695 = vsyncadd %s649, %s694
          %s696 = smul.addr %s30, 2
          %s697 = sadd.s32 %s692, %s696
          %s698 = smul.addr %s697, 64
          %s699 = scalar_lea.hbm %s4, %s698
          %s700 = sshll.u32 %s652, 4
          %s701 = int_to_ptr.vmem [resolvable:$true] %s700
          %706 = dma.vmem_to_hbm [thread:$0]  %s701, 128, %s699, %s649, 64, 64, 4
        $region48: #{tpu_custom_call.1} parent=27 // pred_fallthru
          _
      $region28: #{tpu_custom_call.1} parent=5 // pred_fallthru
        _
      %p707 = scmp.le.s32.totalorder 2, %s21
      // Predicated region
      $region49: #{tpu_custom_call.1} parent=5 // pred_check
        %p708 = pneg %p707
      $region50: #{tpu_custom_call.1} parent=5 // pred_check_branch
        %710 = sbr.rel (%p708) target = $region52
      $region51: #{tpu_custom_call.1} parent=5 // pred_region
        %s711 = ssub.s32 %s21, 2
        // Predicated region
        $region53: #{tpu_custom_call.1} parent=51 // pred_check
          %p712 = pneg %p113
        $region54: #{tpu_custom_call.1} parent=51 // pred_check_branch
          %714 = sbr.rel (%p712) target = $region56
        $region55: #{tpu_custom_call.1} parent=51 // pred_region
          %s715 = sand.u32 %s98, 1
          %s716 = scalar_lea.sflag [#allocation4], %s715
          %s717 = sand.u32 %s98, 1
          %s718 = smul.addr %s717, 8
          %s719 = scalar_lea.vmem [#allocation7], %s718
          %720 = dma.done %s716, 128
        $region56: #{tpu_custom_call.1} parent=51 // pred_fallthru
          _
        // Predicated region
        $region57: #{tpu_custom_call.1} parent=51 // pred_check
          %p721 = pneg %p141
        $region58: #{tpu_custom_call.1} parent=51 // pred_check_branch
          %723 = sbr.rel (%p721) target = $region60
        $region59: #{tpu_custom_call.1} parent=51 // pred_region
          %s724 = sand.u32 %s27, 1
          %s725 = scalar_lea.sflag [#allocation9], %s724
          %s726 = sand.u32 %s126, 1
          %s727 = smul.addr %s726, 8
          %s728 = scalar_lea.vmem [#allocation8], %s727
          %729 = dma.done %s725, 128
        $region60: #{tpu_custom_call.1} parent=51 // pred_fallthru
          _
        // Predicated region
        $region61: #{tpu_custom_call.1} parent=51 // pred_check
          %p730 = pneg %p169
        $region62: #{tpu_custom_call.1} parent=51 // pred_check_branch
          %732 = sbr.rel (%p730) target = $region64
        $region63: #{tpu_custom_call.1} parent=51 // pred_region
          %s733 = sand.u32 %s27, 1
          %s734 = scalar_lea.sflag [#allocation9], %s733
          %s735 = sand.u32 %s154, 1
          %s736 = smul.addr %s735, 8
          %s737 = scalar_lea.vmem [#allocation10], %s736
          %738 = dma.done %s734, 128
        $region64: #{tpu_custom_call.1} parent=51 // pred_fallthru
          _
      $region52: #{tpu_custom_call.1} parent=5 // pred_fallthru
        _
    $region6: #{tpu_custom_call.1} parent=1 // loop_footer
      %s25 = sadd.s32 1, %s21
    $region7: #{tpu_custom_call.1} parent=1 // loop_footer_branch
      %20 = sbr.rel target = $region3
    $region8: #{tpu_custom_call.1} parent=1 // loop_exit
      _
    %739 = vsyncpa [#allocation3], 1
    %s740 = scalar_lea.sflag [#allocation3], 1
    %741 = vsyncpa %s740, 1
    %742 = vsyncpa [#allocation6], 1
    %743 = vsyncpa [#allocation4], 1
    %s744 = scalar_lea.sflag [#allocation4], 1
    %745 = vsyncpa %s744, 1
    %746 = vsyncpa [#allocation9], 1
    %s747 = scalar_lea.sflag [#allocation9], 1
    %748 = vsyncpa %s747, 1

</llo_original>
